<compile_context>
chip_gen: v6e
topology: v6e:2x2x1
jax: 0.10.0
libtpu: 0.0.40
codegen_flags: <defaults>
</compile_context>

<pallas_src>
import functools
import math

import jax
import jax.numpy as jnp
from jax.experimental import pallas as pl
from jax.experimental.pallas import tpu as pltpu


_VMEM_BUDGET = 24 << 20   # keep the double-buffered working set under this (v7x bound)
_VMEM_LIMIT = 32 << 20    # explicit scoped-VMEM limit; safe on v5e/v6e/v7x


def _round_up(x: int, m: int) -> int:
    return (x + m - 1) // m * m


def _round_down(x: int, m: int) -> int:
    return x // m * m


def _pad_to(a, shape, dtype):
    """Zero-pad `a` (cast to `dtype`) up to `shape`; no-op when already matching."""
    a = a.astype(dtype)
    if a.shape == tuple(shape):
        return a
    return jnp.zeros(shape, dtype).at[tuple(slice(0, s) for s in a.shape)].set(a)


def _footprint(tm, tn, tk, cbytes, obytes, with_acc):
    """Approximate VMEM bytes for one grid step (double-buffered operands)."""
    f = 2 * (tm * tk + tk * tn) * cbytes   # x tile + w tile, double-buffered
    f += 2 * 1 * tn * 4                    # bias tile (f32), double-buffered
    f += 2 * tm * tn * obytes              # output tile, double-buffered
    if with_acc:
        f += tm * tn * 4                   # f32 accumulator scratch
    return f


def _choose_tm(batch, max_tm):
    """M tile: multiple of 16 (packed bf16 sublanes), minimal padding waste."""
    max_tm = max(16, max_tm)
    if batch <= max_tm:
        return max(16, _round_up(batch, 16))
    cands = [t for t in (512, 384, 256, 192, 128, 64, 32, 16) if t <= max_tm]
    if not cands:
        return 16
    # minimize padded rows; prefer the larger tile on ties (fewer grid steps)
    return min(cands, key=lambda t: (_round_up(batch, t) - batch, -t))


# ----------------------------- kernels --------------------------------------


def fc_kernel_kres(x_ref, w_ref, b_ref, o_ref, *, relu: bool):
    """K-resident fast path: whole reduction in one MXU call, fused epilogue."""
    y = jnp.dot(x_ref[...], w_ref[...], preferred_element_type=jnp.float32)
    y = y + b_ref[...].astype(jnp.float32)
    if relu:
        y = jnp.maximum(y, 0.0)
    o_ref[...] = y.astype(o_ref.dtype)


def fc_kernel_ktiled(x_ref, w_ref, b_ref, o_ref, acc_ref, *, relu: bool):
    """K-tiled path: f32 VMEM accumulator, bias+ReLU epilogue on the last K step."""
    k = pl.program_id(2)

    @pl.when(k == 0)
    def _():
        acc_ref[...] = jnp.zeros_like(acc_ref)

    acc_ref[...] += jnp.dot(
        x_ref[...], w_ref[...], preferred_element_type=jnp.float32
    )

    @pl.when(k == pl.num_programs(2) - 1)
    def _():
        y = acc_ref[...] + b_ref[...].astype(jnp.float32)
        if relu:
            y = jnp.maximum(y, 0.0)
        o_ref[...] = y.astype(o_ref.dtype)


# ----------------------------- wrapper --------------------------------------


def fc_forward(x, w_t, b, *, relu=True, out_dtype=None,
               compute_dtype=jnp.bfloat16,
               tm=512, tn=512, tk=1024, k_resident=None):
    """x: (B, Fin) ; w_t: (Fin, Fout) = W.T ; b: (Fout,) -> (B, Fout).

    Pass x / w_t already in `compute_dtype` to avoid a per-call cast round-trip.
    """
    B, Fin = x.shape
    Kw, Fout = w_t.shape
    assert Kw == Fin, "weight / in_features mismatch"
    if out_dtype is None:
        out_dtype = x.dtype

    cbytes = jnp.dtype(compute_dtype).itemsize
    obytes = jnp.dtype(out_dtype).itemsize

    Kfull = _round_up(Fin, 128)
    Nfull = _round_up(Fout, 128)

    # ---- tile selection ----
    tm = _choose_tm(B, tm)
    Mp = _round_up(B, tm)
    m_blocks = Mp // tm

    tn = min(_round_up(tn, 128), Nfull)
    # Megacore: guarantee >= 2 parallel blocks when there is only one M block.
    if m_blocks == 1 and Nfull >= 256:
        tn = min(tn, max(128, _round_down(Nfull // 2, 128)))

    tk = min(_round_up(tk, 128), Kfull)

    # K-resident fast path if the whole reduction fits in the VMEM budget.
    if k_resident is None:
        k_resident = _footprint(tm, tn, Kfull, cbytes, obytes, False) <= _VMEM_BUDGET
    if k_resident:
        tk = Kfull

    # Shrink tiles if the double-buffered footprint is over budget (v7x bound).
    while _footprint(tm, tn, tk, cbytes, obytes, not k_resident) > _VMEM_BUDGET:
        if (not k_resident) and tk > 128:
            tk = max(128, tk // 2)
        elif tn > 128:
            tn = max(128, _round_down(tn // 2, 128))
        elif tm > 16:
            tm = max(16, _round_up(tm // 2, 16))
        else:
            break

    Mp = _round_up(B, tm)
    Np = _round_up(Fout, tn)
    Kp = _round_up(Fin, tk)
    m_blocks, n_blocks, k_steps = Mp // tm, Np // tn, Kp // tk

    # ---- operand prep (no-ops when caller already provides aligned compute dtype) ----
    xp = _pad_to(x, (Mp, Kp), compute_dtype)
    wp = _pad_to(w_t, (Kp, Np), compute_dtype)
    bp = _pad_to(b.reshape(1, Fout), (1, Np), jnp.float32)

    # Truthful byte count: x is re-read once per N block, w once per M block.
    cost = pl.CostEstimate(
        flops=2 * Mp * Np * Kp,
        transcendentals=0,
        bytes_accessed=(Mp * Kp * cbytes * n_blocks
                        + Kp * Np * cbytes * m_blocks
                        + Np * 4
                        + Mp * Np * obytes),
    )

    if k_resident:
        grid = (m_blocks, n_blocks)
        in_specs = [
            pl.BlockSpec((tm, Kp), lambda i, j: (i, 0)),   # x tile (full K)
            pl.BlockSpec((Kp, tn), lambda i, j: (0, j)),   # w tile (full K)
            pl.BlockSpec((1, tn), lambda i, j: (0, j)),    # bias tile
        ]
        out_spec = pl.BlockSpec((tm, tn), lambda i, j: (i, j))
        kernel = functools.partial(fc_kernel_kres, relu=relu)
        scratch = []
        sems = ("parallel", "parallel")
    else:
        grid = (m_blocks, n_blocks, k_steps)
        in_specs = [
            pl.BlockSpec((tm, tk), lambda i, j, k: (i, k)),   # x tile
            pl.BlockSpec((tk, tn), lambda i, j, k: (k, j)),   # w tile
            pl.BlockSpec((1, tn), lambda i, j, k: (0, j)),    # bias tile
        ]
        out_spec = pl.BlockSpec((tm, tn), lambda i, j, k: (i, j))
        kernel = functools.partial(fc_kernel_ktiled, relu=relu)
        scratch = [pltpu.VMEM((tm, tn), jnp.float32)]
        sems = ("parallel", "parallel", "arbitrary")

    out = pl.pallas_call(
        kernel,
        out_shape=jax.ShapeDtypeStruct((Mp, Np), out_dtype),
        grid_spec=pltpu.PrefetchScalarGridSpec(
            num_scalar_prefetch=0,
            grid=grid,
            in_specs=in_specs,
            out_specs=out_spec,
            scratch_shapes=scratch,
        ),
        compiler_params=pltpu.CompilerParams(
            dimension_semantics=sems,
            vmem_limit_bytes=_VMEM_LIMIT,
        ),
        cost_estimate=cost,
    )(xp, wp, bp)

    if (Mp, Np) != (B, Fout):
        out = out[:B, :Fout]
    return out


# ----------------------------- demo / self-test -----------------------------

if __name__ == "__main__":
    key = jax.random.PRNGKey(0)
    k_x, k_w, k_b, k_x2, k_w2, k_b2 = jax.random.split(key, 6)

    # ---- Test 1: small FC, K-resident fast path, ReLU on ----
    B, Fin, Fout = 8, 32, 64
    x = jax.random.normal(k_x, (B, Fin), dtype=jnp.float32)
    bound = 1.0 / math.sqrt(Fin)
    w = jax.random.uniform(k_w, (Fout, Fin), jnp.float32, -bound, bound)
    b = jax.random.uniform(k_b, (Fout,), jnp.float32, -bound, bound)

    # Hoisted one-time prep (init-time in a real model): transpose + bf16 cast.
    w_t = jnp.asarray(w.T, dtype=jnp.bfloat16)      # (Fin, Fout)
    x_bf = x.astype(jnp.bfloat16)                   # caller supplies compute dtype

    y = fc_forward(x_bf, w_t, b, relu=True, out_dtype=jnp.float32)
    y = jax.block_until_ready(y)

    y_ref = jnp.maximum(
        x_bf.astype(jnp.float32) @ w_t.astype(jnp.float32) + b, 0.0
    )
    assert y.shape == (B, Fout)
    assert jnp.allclose(y, y_ref, atol=5e-3, rtol=5e-3), "mismatch vs reference (test 1)"

    # ---- Test 2: force the K-tiled accumulator path (grid K loop), ReLU off ----
    B2, Fin2, Fout2 = 64, 512, 384
    x2 = jax.random.normal(k_x2, (B2, Fin2), dtype=jnp.float32)
    bound2 = 1.0 / math.sqrt(Fin2)
    w2 = jax.random.uniform(k_w2, (Fout2, Fin2), jnp.float32, -bound2, bound2)
    b2 = jax.random.uniform(k_b2, (Fout2,), jnp.float32, -bound2, bound2)

    w2_t = jnp.asarray(w2.T, dtype=jnp.bfloat16)
    x2_bf = x2.astype(jnp.bfloat16)

    y2 = fc_forward(x2_bf, w2_t, b2, relu=False, out_dtype=jnp.float32,
                    tk=128, k_resident=False)
    y2 = jax.block_until_ready(y2)

    y2_ref = x2_bf.astype(jnp.float32) @ w2_t.astype(jnp.float32) + b2
    assert y2.shape == (B2, Fout2)
    assert jnp.allclose(y2, y2_ref, atol=5e-3, rtol=5e-3), "mismatch vs reference (test 2)"

    print("KERNEL_OK")
</pallas_src>

<mosaic_0001>
module attributes {stable_mosaic.version = 11 : i64} {
  func.func @fc_kernel_kres(%arg0: i32, %arg1: i32, %arg2: memref<16x128xbf16, #tpu.memory_space<vmem>>, %arg3: memref<128x128xbf16, #tpu.memory_space<vmem>>, %arg4: memref<1x128xf32, #tpu.memory_space<vmem>>, %arg5: memref<16x128xf32, #tpu.memory_space<vmem>>) attributes {dimension_semantics = [#tpu.dimension_semantics<parallel>, #tpu.dimension_semantics<parallel>], iteration_bounds = array<i64: 1, 1>, scalar_prefetch = 0 : i64, scratch_operands = 0 : i64, tpu.core_type = #tpu.core_type<tc>, window_params = [{transform_indices = @transform_0, window_bounds = array<i64: 16, 128>}, {transform_indices = @transform_1, window_bounds = array<i64: 128, 128>}, {transform_indices = @transform_2, window_bounds = array<i64: 1, 128>}, {transform_indices = @transform_3, window_bounds = array<i64: 16, 128>}]} {
    %c0 = arith.constant 0 : index
    %c0_0 = arith.constant 0 : index
    %0 = vector.load %arg2[%c0, %c0_0] : memref<16x128xbf16, #tpu.memory_space<vmem>>, vector<16x128xbf16>
    %c0_1 = arith.constant 0 : index
    %c0_2 = arith.constant 0 : index
    %1 = vector.load %arg3[%c0_1, %c0_2] : memref<128x128xbf16, #tpu.memory_space<vmem>>, vector<128x128xbf16>
    %cst = arith.constant dense<0.000000e+00> : vector<16x128xf32>
    %2 = tpu.matmul %0, %1, %cst {dimension_numbers = #tpu.dot_dimension_numbers<[1], [0], [0], [1], [0, 0, 1, 1], [], []>} : vector<16x128xbf16>, vector<128x128xbf16>, vector<16x128xf32> -> vector<16x128xf32>
    %c0_3 = arith.constant 0 : index
    %c0_4 = arith.constant 0 : index
    %3 = vector.load %arg4[%c0_3, %c0_4] : memref<1x128xf32, #tpu.memory_space<vmem>>, vector<1x128xf32>
    %4 = vector.broadcast %3 : vector<1x128xf32> to vector<16x128xf32>
    %5 = arith.addf %2, %4 : vector<16x128xf32>
    %cst_5 = arith.constant 0.000000e+00 : f32
    %6 = vector.broadcast %cst_5 : f32 to vector<16x128xf32>
    %7 = arith.maximumf %5, %6 : vector<16x128xf32>
    %c0_6 = arith.constant 0 : index
    %c0_7 = arith.constant 0 : index
    %8 = vector.load %arg5[%c0_6, %c0_7] : memref<16x128xf32, #tpu.memory_space<vmem>>, vector<16x128xf32>
    tpu.vector_store %arg5[%c0_6, %c0_7], %7 {strides = array<i32>} : memref<16x128xf32, #tpu.memory_space<vmem>>, vector<16x128xf32>,
    return
  }
  func.func @transform_0(%arg0: i32, %arg1: i32) -> (i32, i32) {
    %c0_i32 = arith.constant 0 : i32
    %c0_i32_0 = arith.constant 0 : i32
    return %arg0, %c0_i32 : i32, i32
  }
  func.func @transform_1(%arg0: i32, %arg1: i32) -> (i32, i32) {
    %c0_i32 = arith.constant 0 : i32
    %c0_i32_0 = arith.constant 0 : i32
    return %c0_i32, %arg1 : i32, i32
  }
  func.func @transform_2(%arg0: i32, %arg1: i32) -> (i32, i32) {
    %c0_i32 = arith.constant 0 : i32
    %c0_i32_0 = arith.constant 0 : i32
    return %c0_i32, %arg1 : i32, i32
  }
  func.func @transform_3(%arg0: i32, %arg1: i32) -> (i32, i32) {
    %c0_i32 = arith.constant 0 : i32
    return %arg0, %arg1 : i32, i32
  }
}

</mosaic_0001>

<llo_original>
// kernel: tpu_custom_call.1
$region0: #{tpu_custom_call.1}
  #allocation0 [shape = 'u32[]', space=smem, size = 0x4, offset = 0x4, fixed_abs, tag = 'smem constant byte address 0x4 - core index']
  #allocation1 [shape = 'u32[144,128]{1,0:T(1,128)}', space=vmem, size = 0x12000, scoped, tag = 'internal scratch']
  %s0 = inlined_call_operand.hbm [shape: bf16[16,128], index: 0, kind: input, shape index: {}]
  %s1 = inlined_call_operand.hbm [shape: bf16[128,128], index: 1, kind: input, shape index: {}]
  %s2 = inlined_call_operand.vmem [shape: f32[1,128], index: 2, kind: input, shape index: {}]
  %s3 = inlined_call_operand.hbm [shape: f32[16,128], index: 3, kind: output, shape index: {}]
  %s4 = sld [smem:[#allocation0]]
  $region30: #{tpu_custom_call.1} parent=0
    _
  %s6 = ssub.s32 1, %s4
  %s7 = scalar_select 0, %s6, %s4
  $region1: #{tpu_custom_call.1} parent=0
    #allocation2 [shape = 'u8[4096]{0}', space=vmem, size = 0x1000, scoped, tag = 'input window, operand 0, single buffered']
    #allocation3 [shape = 's32[1]{0}', space=sflag, size = 0x4, scoped, tag = 'scoped memory for tpu_custom_call.1']
    #allocation4 [shape = 's32[1]{0}', space=sflag, size = 0x4, scoped, tag = 'scoped memory for tpu_custom_call.1']
    #allocation5 [shape = 'u8[32768]{0}', space=vmem, size = 0x8000, scoped, tag = 'input window, operand 1, single buffered']
    #allocation6 [shape = 's32[1]{0}', space=sflag, size = 0x4, scoped, tag = 'scoped memory for tpu_custom_call.1']
    #allocation7 [shape = 'u8[8192]{0}', space=vmem, size = 0x2000, scoped, tag = 'output window, operand 0, single buffered']
    %8 = vsyncpa [#allocation3], 0
    %9 = vsyncpa [#allocation6], 0
    %10 = vsyncpa [#allocation4], 0
    // Predicated region
    $region2: #{tpu_custom_call.1} parent=1 // pred_check
      _
    $region3: #{tpu_custom_call.1} parent=1 // pred_check_branch
      %12 = sbr.rel (0) target = $region5
    $region4: #{tpu_custom_call.1} parent=1 // pred_region
      %s14 = ssub.s32 128, 128
      %15 = vsyncadd [#allocation3], %s14
      %s16 = sshll.u32 [#allocation2], 4
      %s17 = int_to_ptr.vmem [resolvable:$true] %s16
      %22 = dma.hbm_to_vmem [thread:$0]  %s0, 128, %s17, [#allocation3], 64, 64, 4
    $region5: #{tpu_custom_call.1} parent=1 // pred_fallthru
      _
    // Predicated region
    $region6: #{tpu_custom_call.1} parent=1 // pred_check
      _
    $region7: #{tpu_custom_call.1} parent=1 // pred_check_branch
      %24 = sbr.rel (0) target = $region9
    $region8: #{tpu_custom_call.1} parent=1 // pred_region
      %s26 = ssub.s32 1024, 1024
      %27 = vsyncadd [#allocation6], %s26
      %s28 = sshll.u32 [#allocation5], 4
      %s29 = int_to_ptr.vmem [resolvable:$true] %s28
      %34 = dma.hbm_to_vmem [thread:$0]  %s1, 1024, %s29, [#allocation6], 64, 64, 4
    $region9: #{tpu_custom_call.1} parent=1 // pred_fallthru
      _
    // Predicated region
    $region10: #{tpu_custom_call.1} parent=1 // pred_check
      _
    $region11: #{tpu_custom_call.1} parent=1 // pred_check_branch
      %36 = sbr.rel (0) target = $region13
    $region12: #{tpu_custom_call.1} parent=1 // pred_region
      _
    $region13: #{tpu_custom_call.1} parent=1 // pred_fallthru
      _
    // Predicated region
    $region14: #{tpu_custom_call.1} parent=1 // pred_check
      _
    $region15: #{tpu_custom_call.1} parent=1 // pred_check_branch
      %38 = sbr.rel (0) target = $region17
    $region16: #{tpu_custom_call.1} parent=1 // pred_region
      %39 = dma.done [#allocation3], 128
    $region17: #{tpu_custom_call.1} parent=1 // pred_fallthru
      _
    // Predicated region
    $region18: #{tpu_custom_call.1} parent=1 // pred_check
      _
    $region19: #{tpu_custom_call.1} parent=1 // pred_check_branch
      %41 = sbr.rel (0) target = $region21
    $region20: #{tpu_custom_call.1} parent=1 // pred_region
      %42 = dma.done [#allocation6], 1024
    $region21: #{tpu_custom_call.1} parent=1 // pred_fallthru
      _
    %v44 = vld [vmem:[#allocation2] sm:$0xf]
    %v45 = vld [vmem:[#allocation2 + $0x4] sm:$0xf]
    %v46 = vld [vmem:[#allocation5] sm:$0xf]
    %v47 = vld [vmem:[#allocation5 + $0x4] sm:$0xf]
    %v48 = vld [vmem:[#allocation5 + $0x8] sm:$0xf]
    %v49 = vld [vmem:[#allocation5 + $0xc] sm:$0xf]
    %v50 = vld [vmem:[#allocation5 + $0x10] sm:$0xf]
    %v51 = vld [vmem:[#allocation5 + $0x14] sm:$0xf]
    %v52 = vld [vmem:[#allocation5 + $0x18] sm:$0xf]
    %v53 = vld [vmem:[#allocation5 + $0x1c] sm:$0xf]
    %v54 = vld [vmem:[#allocation5 + $0x20] sm:$0xf]
    %v55 = vld [vmem:[#allocation5 + $0x24] sm:$0xf]
    %v56 = vld [vmem:[#allocation5 + $0x28] sm:$0xf]
    %v57 = vld [vmem:[#allocation5 + $0x2c] sm:$0xf]
    %v58 = vld [vmem:[#allocation5 + $0x30] sm:$0xf]
    %v59 = vld [vmem:[#allocation5 + $0x34] sm:$0xf]
    %v60 = vld [vmem:[#allocation5 + $0x38] sm:$0xf]
    %v61 = vld [vmem:[#allocation5 + $0x3c] sm:$0xf]
    %v62 = vld [vmem:[%s2] sm:$0x1]
    %v64 = vlaneseq
    %v65 = vshrl.u32 %v64, 7
    %v66 = vsub.s32 0, %v65
    %v67 = vrot.slane %v62, %v66
    %v71 = vunpack.c.l.b16 %v44
    %v72 = vunpack.c.l.b16 %v45
    %v73 = vpack.c.b16 %v72, %v71
    %v91 = vunpack.c.l.b16 %v46
    %v92 = vunpack.c.l.b16 %v47
    %v93 = vunpack.c.l.b16 %v48
    %v94 = vunpack.c.l.b16 %v49
    %v95 = vunpack.c.l.b16 %v50
    %v96 = vunpack.c.l.b16 %v51
    %v97 = vunpack.c.l.b16 %v52
    %v98 = vunpack.c.l.b16 %v53
    %v99 = vunpack.c.l.b16 %v54
    %v100 = vunpack.c.l.b16 %v55
    %v101 = vunpack.c.l.b16 %v56
    %v102 = vunpack.c.l.b16 %v57
    %v103 = vunpack.c.l.b16 %v58
    %v104 = vunpack.c.l.b16 %v59
    %v105 = vunpack.c.l.b16 %v60
    %v106 = vunpack.c.l.b16 %v61
    %v107 = vpack.c.b16 %v92, %v91
    %v108 = vpack.c.b16 %v94, %v93
    %v109 = vpack.c.b16 %v96, %v95
    %v110 = vpack.c.b16 %v98, %v97
    %v111 = vpack.c.b16 %v100, %v99
    %v112 = vpack.c.b16 %v102, %v101
    %v113 = vpack.c.b16 %v104, %v103
    %v114 = vpack.c.b16 %v106, %v105
    %123 = vmatprep.subr.bf16.mxu0 0
    %124 = vmatpush1.bf16.msra.mxu0 %v114
    %125 = vmatprep.subr.bf16.mxu0 0
    %126 = vmatpush1.bf16.msra.mxu0 %v113
    %127 = vmatprep.subr.bf16.mxu0 0
    %128 = vmatpush1.bf16.msra.mxu0 %v112
    %129 = vmatprep.subr.bf16.mxu0 0
    %130 = vmatpush1.bf16.msra.mxu0 %v111
    %131 = vmatprep.subr.bf16.mxu0 0
    %132 = vmatpush1.bf16.msra.mxu0 %v110
    %133 = vmatprep.subr.bf16.mxu0 0
    %134 = vmatpush1.bf16.msra.mxu0 %v109
    %135 = vmatprep.subr.bf16.mxu0 0
    %136 = vmatpush1.bf16.msra.mxu0 %v108
    %137 = vmatprep.subr.bf16.mxu0 0
    %138 = vmatpush1.bf16.msra.mxu0 %v107
    %139 = vmatprep.subr.bf16.mxu0 0
    %140 = vmatpush2.bf16.msra.mxu0 0
    %141 = vmatprep.subr.bf16.mxu0 0
    %142 = vmatpush2.bf16.msra.mxu0 0
    %143 = vmatprep.subr.bf16.mxu0 0
    %144 = vmatpush2.bf16.msra.mxu0 0
    %145 = vmatprep.subr.bf16.mxu0 0
    %146 = vmatpush2.bf16.msra.mxu0 0
    %147 = vmatprep.subr.bf16.mxu0 0
    %148 = vmatpush2.bf16.msra.mxu0 0
    %149 = vmatprep.subr.bf16.mxu0 0
    %150 = vmatpush2.bf16.msra.mxu0 0
    %151 = vmatprep.subr.bf16.mxu0 0
    %152 = vmatpush2.bf16.msra.mxu0 0
    %153 = vmatprep.subr.bf16.mxu0 0
    %154 = vmatpush2.bf16.msra.mxu0 0
    %155 = vmatprep.mubr.bf16.mxu0 0
    %156 = vmatmul.mubr.bf16.gmra.mxu0 %v73
    %v157 = vpop.f32.mrf.mxu0
    %v158 = vadd.f32 %v67, %v157
    %v159 = vpop.f32.mrf.mxu0
    %v160 = vpop.f32.mrf.mxu0
    %v161 = vadd.f32 %v67, %v160
    %v162 = vpop.f32.mrf.mxu0
    %163 = vdwg.mxu0
    %v164 = vmax.f32 %v158, 0.0
    %v165 = vmax.f32 %v161, 0.0
    %166 = vst [vmem:[#allocation7] sm:$0xff] %v164
    %167 = vst [vmem:[#allocation7 + $0x8] sm:$0xff] %v165
    // Predicated region
    $region22: #{tpu_custom_call.1} parent=1 // pred_check
      _
    $region23: #{tpu_custom_call.1} parent=1 // pred_check_branch
      %169 = sbr.rel (0) target = $region25
    $region24: #{tpu_custom_call.1} parent=1 // pred_region
      %s171 = ssub.s32 256, 256
      %172 = vsyncadd [#allocation4], %s171
      %s173 = sshll.u32 [#allocation7], 4
      %s174 = int_to_ptr.vmem [resolvable:$true] %s173
      %179 = dma.vmem_to_hbm [thread:$0]  %s174, 256, %s3, [#allocation4], 128, 128, 8
    $region25: #{tpu_custom_call.1} parent=1 // pred_fallthru
      _
    // Predicated region
    $region26: #{tpu_custom_call.1} parent=1 // pred_check
      _
    $region27: #{tpu_custom_call.1} parent=1 // pred_check_branch
      %181 = sbr.rel (0) target = $region29
    $region28: #{tpu_custom_call.1} parent=1 // pred_region
      %182 = dma.done [#allocation4], 256
    $region29: #{tpu_custom_call.1} parent=1 // pred_fallthru
      _
    %183 = vsyncpa [#allocation3], 1
    %184 = vsyncpa [#allocation6], 1
    %185 = vsyncpa [#allocation4], 1

</llo_original>
